<compile_context>
chip_gen: v6e
topology: v6e:2x2x1
jax: 0.10.0
libtpu: 0.0.40
codegen_flags: <defaults>
</compile_context>

<pallas_src>
import jax
import jax.numpy as jnp
from jax.experimental import pallas as pl
from jax.experimental.pallas import tpu as pltpu


_LANES = 128


# ---------------- helpers ----------------

def _round_up(x, m):
    return ((x + m - 1) // m) * m


def _pick_tile(dim, pref, align):
    """Largest tile <= pref that is a multiple of `align` and covers dim padded."""
    return min(pref, _round_up(dim, align))


def _vmem_limit_bytes():
    """Generation-aware VMEM budget: ~3/4 of physical capacity, capped."""
    cap = 64 * 1024 * 1024  # safe fallback (v7x-sized)
    try:
        info_fn = getattr(pltpu, "get_tpu_info", None)
        if info_fn is not None:
            cap = int(info_fn().vmem_capacity_bytes)
    except Exception:
        pass
    return int(min(100 * 1024 * 1024, max(32 * 1024 * 1024, (cap * 3) // 4)))


def _pad_cast_x(x, b_pad, d_pad, dtype):
    """Cast x to the matmul dtype; pad only if shapes actually need it."""
    B, D = x.shape
    xb = x.astype(dtype)
    if (b_pad, d_pad) == (B, D):
        return xb
    return jnp.pad(xb, ((0, b_pad - B), (0, d_pad - D)))


# ---------------- kernels ----------------

def linear_kernel(x_ref, wt_ref, b_ref, out_ref, acc_ref):
    """out = x @ W^T + b, tiled over (B, C, D) with f32 accumulation."""
    k = pl.program_id(2)

    @pl.when(k == 0)
    def _():
        acc_ref[...] = jnp.zeros_like(acc_ref)

    acc_ref[...] += jnp.dot(x_ref[...], wt_ref[...],
                            preferred_element_type=jnp.float32)

    @pl.when(k == pl.num_programs(2) - 1)
    def _():
        out_ref[...] = (acc_ref[...] + b_ref[...]).astype(out_ref.dtype)


def _make_ce_kernel(num_classes, tn):
    """Fused linear + online-softmax cross-entropy; emits per-batch-tile
    partial loss sums so the batch grid axis can be 'parallel' (megacore)."""

    def ce_kernel(x_ref, wt_ref, b_ref, y_ref, loss_ref,
                  acc_ref, m_ref, l_ref, corr_ref):
        c_i = pl.program_id(1)
        d_i = pl.program_id(2)
        nc = pl.num_programs(1)
        nd = pl.num_programs(2)

        # reset the online-softmax state at the start of every batch tile
        @pl.when(jnp.logical_and(c_i == 0, d_i == 0))
        def _():
            m_ref[...] = jnp.full_like(m_ref, -jnp.inf)
            l_ref[...] = jnp.zeros_like(l_ref)
            corr_ref[...] = jnp.zeros_like(corr_ref)

        @pl.when(d_i == 0)
        def _():
            acc_ref[...] = jnp.zeros_like(acc_ref)

        acc_ref[...] += jnp.dot(x_ref[...], wt_ref[...],
                                preferred_element_type=jnp.float32)

        # logits tile complete -> online softmax update over this class tile
        @pl.when(d_i == nd - 1)
        def _():
            logits = acc_ref[...] + b_ref[...]                          # (tm, tn)
            cls_ids = c_i * tn + jax.lax.broadcasted_iota(
                jnp.int32, logits.shape, 1)
            masked = jnp.where(cls_ids < num_classes, logits, -jnp.inf)

            m_new = jnp.maximum(m_ref[...],
                                jnp.max(masked, axis=-1, keepdims=True))
            alpha = jnp.exp(m_ref[...] - m_new)
            l_ref[...] = alpha * l_ref[...] + jnp.sum(
                jnp.exp(masked - m_new), axis=-1, keepdims=True)
            # masked reduce instead of a onehot temporary
            corr_ref[...] += jnp.sum(
                jnp.where(cls_ids == y_ref[...], logits, 0.0),
                axis=-1, keepdims=True)
            m_ref[...] = m_new

            @pl.when(c_i == nc - 1)
            def _():
                lse = m_ref[...] + jnp.log(l_ref[...])                  # (tm, 1)
                labels = y_ref[...]
                # Only labels in [0, num_classes) contribute (padded rows get -1;
                # also covers torch's ignore_index=-100 semantics).
                valid = jnp.logical_and(labels >= 0, labels < num_classes)
                per_row = jnp.where(valid, lse - corr_ref[...], 0.0)    # (tm, 1)
                psum = jnp.sum(per_row, axis=0, keepdims=True)          # (1, 1)
                loss_ref[...] = jnp.broadcast_to(psum, (1, _LANES))

    return ce_kernel


# ---------------- parameters ----------------

def init_params(key, input_size, num_classes):
    """nn.Linear default init: U(-1/sqrt(fan_in), 1/sqrt(fan_in))."""
    kw, kb = jax.random.split(key)
    bound = 1.0 / float(input_size) ** 0.5
    weight = jax.random.uniform(kw, (num_classes, input_size),
                                minval=-bound, maxval=bound, dtype=jnp.float32)
    bias = jax.random.uniform(kb, (num_classes,),
                              minval=-bound, maxval=bound, dtype=jnp.float32)
    return {"weight": weight, "bias": bias}


def prepare_params(params, *, tk_pref=1024, tn_pref=512, dtype=jnp.bfloat16):
    """One-time prep: transpose weight to (D, C), cast to bf16 and pad to
    lane/MXU-aligned shapes. Bias stays f32 (added after the f32 accumulator)."""
    w = params["weight"]                         # (C, D) f32
    b = params["bias"].astype(jnp.float32)       # (C,)
    C, D = w.shape
    tk = _pick_tile(D, tk_pref, 128)
    tn = _pick_tile(C, tn_pref, 128)
    d_pad = _round_up(D, tk)
    c_pad = _round_up(C, tn)
    wt = jnp.zeros((d_pad, c_pad), dtype).at[:D, :C].set(w.T.astype(dtype))
    b2 = jnp.zeros((1, c_pad), jnp.float32).at[0, :C].set(b)
    return {"wt": wt, "bias": b2, "D": D, "C": C,
            "d_pad": d_pad, "c_pad": c_pad, "tk": tk, "tn": tn, "dtype": dtype}


# ---------------- wrappers ----------------

def linear_forward(x, prep, *, tm_pref=512, out_dtype=jnp.float32):
    """logits = x @ W^T + b ; x:(B,D) -> (B,C)."""
    B, D = x.shape
    assert D == prep["D"]
    C = prep["C"]
    d_pad, c_pad, tk, tn = prep["d_pad"], prep["c_pad"], prep["tk"], prep["tn"]
    tm = _pick_tile(B, tm_pref, 8)
    b_pad = _round_up(B, tm)
    x_p = _pad_cast_x(x, b_pad, d_pad, prep["dtype"])

    grid = (b_pad // tm, c_pad // tn, d_pad // tk)
    flops = 2 * b_pad * d_pad * c_pad
    itemsize = jnp.dtype(prep["dtype"]).itemsize
    bytes_accessed = (itemsize * (b_pad * d_pad + d_pad * c_pad)
                      + 4 * c_pad
                      + jnp.dtype(out_dtype).itemsize * b_pad * c_pad)

    out = pl.pallas_call(
        linear_kernel,
        out_shape=jax.ShapeDtypeStruct((b_pad, c_pad), out_dtype),
        grid_spec=pltpu.PrefetchScalarGridSpec(
            num_scalar_prefetch=0,
            grid=grid,
            in_specs=[
                pl.BlockSpec((tm, tk), lambda i, j, k: (i, k)),
                pl.BlockSpec((tk, tn), lambda i, j, k: (k, j)),
                pl.BlockSpec((1, tn), lambda i, j, k: (0, j)),
            ],
            out_specs=pl.BlockSpec((tm, tn), lambda i, j, k: (i, j)),
            scratch_shapes=[pltpu.VMEM((tm, tn), jnp.float32)],
        ),
        compiler_params=pltpu.CompilerParams(
            dimension_semantics=("parallel", "parallel", "arbitrary"),
            vmem_limit_bytes=_vmem_limit_bytes(),
        ),
        cost_estimate=pl.CostEstimate(flops=flops, transcendentals=0,
                                      bytes_accessed=int(bytes_accessed)),
    )(x_p, prep["wt"], prep["bias"])
    if b_pad == B and c_pad == C:
        return out
    return out[:B, :C]


def ce_loss_forward(x, prep, y, *, tm_pref=512):
    """Scalar mean cross-entropy of the linear layer's logits against int labels.

    Labels outside [0, num_classes) (e.g. torch's ignore_index=-100) are excluded
    from both the sum and the divisor.
    """
    B, D = x.shape
    assert D == prep["D"]
    C = prep["C"]
    d_pad, c_pad, tk, tn = prep["d_pad"], prep["c_pad"], prep["tk"], prep["tn"]
    tm = _pick_tile(B, tm_pref, 8)
    b_pad = _round_up(B, tm)
    nb = b_pad // tm

    x_p = _pad_cast_x(x, b_pad, d_pad, prep["dtype"])
    y_i = y.astype(jnp.int32)
    if b_pad == B:
        y_p = y_i.reshape(B, 1)
    else:
        # Padded rows get label -1: invalid -> excluded from sum and count.
        y_p = jnp.full((b_pad, 1), -1, jnp.int32).at[:B, 0].set(y_i)

    grid = (nb, c_pad // tn, d_pad // tk)
    flops = 2 * b_pad * d_pad * c_pad + 6 * b_pad * c_pad
    itemsize = jnp.dtype(prep["dtype"]).itemsize
    bytes_accessed = (itemsize * (b_pad * d_pad + d_pad * c_pad)
                      + 4 * (c_pad + b_pad + nb * _LANES))

    partials = pl.pallas_call(
        _make_ce_kernel(C, tn),
        out_shape=jax.ShapeDtypeStruct((nb, _LANES), jnp.float32),
        grid_spec=pltpu.PrefetchScalarGridSpec(
            num_scalar_prefetch=0,
            grid=grid,
            in_specs=[
                pl.BlockSpec((tm, tk), lambda b, c, d: (b, d)),
                pl.BlockSpec((tk, tn), lambda b, c, d: (d, c)),
                pl.BlockSpec((1, tn), lambda b, c, d: (0, c)),
                pl.BlockSpec((tm, 1), lambda b, c, d: (b, 0)),
            ],
            out_specs=pl.BlockSpec((1, _LANES), lambda b, c, d: (b, 0)),
            scratch_shapes=[
                pltpu.VMEM((tm, tn), jnp.float32),   # logits accumulator
                pltpu.VMEM((tm, 1), jnp.float32),    # running max m
                pltpu.VMEM((tm, 1), jnp.float32),    # running sum l
                pltpu.VMEM((tm, 1), jnp.float32),    # correct-logit accumulator
            ],
        ),
        compiler_params=pltpu.CompilerParams(
            # Each batch tile owns its own partial-loss output block, so the
            # batch axis is safely "parallel" (uses both v7x TensorCores).
            dimension_semantics=("parallel", "arbitrary", "arbitrary"),
            vmem_limit_bytes=_vmem_limit_bytes(),
        ),
        cost_estimate=pl.CostEstimate(flops=flops,
                                      transcendentals=b_pad * c_pad,
                                      bytes_accessed=int(bytes_accessed)),
    )(x_p, prep["wt"], prep["bias"], y_p)

    valid = jnp.logical_and(y_i >= 0, y_i < C)
    count = jnp.sum(valid.astype(jnp.float32))
    total = jnp.sum(partials[:, 0])
    return total / jnp.maximum(count, 1.0)


def torch_model_forward(x, prep, y=None):
    """Mirror of TorchModel.forward: logits if y is None, else CE loss."""
    if y is None:
        return linear_forward(x, prep)
    return ce_loss_forward(x, prep, y)


# ---------------- demo / self-check ----------------

if __name__ == "__main__":
    B, D, C = 16, 32, 8          # batch, input_size, num_classes (small demo shapes)
    key = jax.random.PRNGKey(0)
    k_param, k_x, k_y = jax.random.split(key, 3)

    params = init_params(k_param, D, C)
    prep = prepare_params(params)            # one-time transpose + cast + pad
    x = jax.random.normal(k_x, (B, D), dtype=jnp.float32)
    y = jax.random.randint(k_y, (B,), 0, C, dtype=jnp.int32)

    # inference path: logits
    logits = jax.block_until_ready(torch_model_forward(x, prep))
    # training path: cross-entropy loss
    loss = jax.block_until_ready(torch_model_forward(x, prep, y))

    # bf16-operand / f32-accumulate reference (matches the kernel's MXU math)
    xb = x.astype(jnp.bfloat16).astype(jnp.float32)
    wb = params["weight"].astype(jnp.bfloat16).astype(jnp.float32)
    ref_logits = xb @ wb.T + params["bias"]
    ref_lse = jax.scipy.special.logsumexp(ref_logits, axis=-1)
    ref_loss = jnp.mean(ref_lse - ref_logits[jnp.arange(B), y])

    # full-precision reference (loose: bf16 operands differ at ~1e-3 rel)
    ref_logits_f32 = x @ params["weight"].T + params["bias"]

    assert jnp.allclose(logits, ref_logits, atol=1e-4, rtol=1e-4)
    assert jnp.allclose(loss, ref_loss, atol=1e-4, rtol=1e-4)
    assert jnp.allclose(logits, ref_logits_f32, atol=5e-2, rtol=5e-2)

    print("KERNEL_OK")
</pallas_src>

<mosaic_0001>
module attributes {stable_mosaic.version = 11 : i64} {
  func.func @linear_kernel(%arg0: i32, %arg1: i32, %arg2: i32, %arg3: memref<16x128xbf16, #tpu.memory_space<vmem>>, %arg4: memref<128x128xbf16, #tpu.memory_space<vmem>>, %arg5: memref<1x128xf32, #tpu.memory_space<vmem>>, %arg6: memref<16x128xf32, #tpu.memory_space<vmem>>, %arg7: memref<16x128xf32, #tpu.memory_space<vmem>>) attributes {dimension_semantics = [#tpu.dimension_semantics<parallel>, #tpu.dimension_semantics<parallel>, #tpu.dimension_semantics<arbitrary>], iteration_bounds = array<i64: 1, 1, 1>, scalar_prefetch = 0 : i64, scratch_operands = 1 : i64, tpu.core_type = #tpu.core_type<tc>, window_params = [{transform_indices = @transform_0, window_bounds = array<i64: 16, 128>}, {transform_indices = @transform_1, window_bounds = array<i64: 128, 128>}, {transform_indices = @transform_2, window_bounds = array<i64: 1, 128>}, {transform_indices = @transform_3, window_bounds = array<i64: 16, 128>}]} {
    %c0_i32 = arith.constant 0 : i32
    %0 = arith.cmpi eq, %arg2, %c0_i32 : i32
    %1 = arith.extui %0 : i1 to i32
    %c0_i32_0 = arith.constant 0 : i32
    %2 = arith.cmpi ne, %1, %c0_i32_0 : i32
    scf.if %2 {
      %cst_10 = arith.constant 0.000000e+00 : f32
      %12 = vector.broadcast %cst_10 : f32 to vector<16x128xf32>
      %c0_11 = arith.constant 0 : index
      %c0_12 = arith.constant 0 : index
      %13 = vector.load %arg7[%c0_11, %c0_12] : memref<16x128xf32, #tpu.memory_space<vmem>>, vector<16x128xf32>
      tpu.vector_store %arg7[%c0_11, %c0_12], %12 {strides = array<i32>} : memref<16x128xf32, #tpu.memory_space<vmem>>, vector<16x128xf32>,
    } else {
    }
    %c0 = arith.constant 0 : index
    %c0_1 = arith.constant 0 : index
    %3 = vector.load %arg7[%c0, %c0_1] : memref<16x128xf32, #tpu.memory_space<vmem>>, vector<16x128xf32>
    %c0_2 = arith.constant 0 : index
    %c0_3 = arith.constant 0 : index
    %4 = vector.load %arg3[%c0_2, %c0_3] : memref<16x128xbf16, #tpu.memory_space<vmem>>, vector<16x128xbf16>
    %c0_4 = arith.constant 0 : index
    %c0_5 = arith.constant 0 : index
    %5 = vector.load %arg4[%c0_4, %c0_5] : memref<128x128xbf16, #tpu.memory_space<vmem>>, vector<128x128xbf16>
    %cst = arith.constant dense<0.000000e+00> : vector<16x128xf32>
    %6 = tpu.matmul %4, %5, %cst {dimension_numbers = #tpu.dot_dimension_numbers<[1], [0], [0], [1], [0, 0, 1, 1], [], []>} : vector<16x128xbf16>, vector<128x128xbf16>, vector<16x128xf32> -> vector<16x128xf32>
    %7 = arith.addf %3, %6 : vector<16x128xf32>
    %c0_6 = arith.constant 0 : index
    %c0_7 = arith.constant 0 : index
    %8 = vector.load %arg7[%c0_6, %c0_7] : memref<16x128xf32, #tpu.memory_space<vmem>>, vector<16x128xf32>
    tpu.vector_store %arg7[%c0_6, %c0_7], %7 {strides = array<i32>} : memref<16x128xf32, #tpu.memory_space<vmem>>, vector<16x128xf32>,
    %c0_i32_8 = arith.constant 0 : i32
    %9 = arith.cmpi eq, %arg2, %c0_i32_8 : i32
    %10 = arith.extui %9 : i1 to i32
    %c0_i32_9 = arith.constant 0 : i32
    %11 = arith.cmpi ne, %10, %c0_i32_9 : i32
    scf.if %11 {
      %c0_10 = arith.constant 0 : index
      %c0_11 = arith.constant 0 : index
      %12 = vector.load %arg7[%c0_10, %c0_11] : memref<16x128xf32, #tpu.memory_space<vmem>>, vector<16x128xf32>
      %c0_12 = arith.constant 0 : index
      %c0_13 = arith.constant 0 : index
      %13 = vector.load %arg5[%c0_12, %c0_13] : memref<1x128xf32, #tpu.memory_space<vmem>>, vector<1x128xf32>
      %14 = vector.broadcast %13 : vector<1x128xf32> to vector<16x128xf32>
      %15 = arith.addf %12, %14 : vector<16x128xf32>
      %c0_14 = arith.constant 0 : index
      %c0_15 = arith.constant 0 : index
      %16 = vector.load %arg6[%c0_14, %c0_15] : memref<16x128xf32, #tpu.memory_space<vmem>>, vector<16x128xf32>
      tpu.vector_store %arg6[%c0_14, %c0_15], %15 {strides = array<i32>} : memref<16x128xf32, #tpu.memory_space<vmem>>, vector<16x128xf32>,
    } else {
    }
    return
  }
  func.func @transform_0(%arg0: i32, %arg1: i32, %arg2: i32) -> (i32, i32) {
    %c0_i32 = arith.constant 0 : i32
    return %arg0, %arg2 : i32, i32
  }
  func.func @transform_1(%arg0: i32, %arg1: i32, %arg2: i32) -> (i32, i32) {
    %c0_i32 = arith.constant 0 : i32
    return %arg2, %arg1 : i32, i32
  }
  func.func @transform_2(%arg0: i32, %arg1: i32, %arg2: i32) -> (i32, i32) {
    %c0_i32 = arith.constant 0 : i32
    %c0_i32_0 = arith.constant 0 : i32
    return %c0_i32, %arg1 : i32, i32
  }
  func.func @transform_3(%arg0: i32, %arg1: i32, %arg2: i32) -> (i32, i32) {
    %c0_i32 = arith.constant 0 : i32
    return %arg0, %arg1 : i32, i32
  }
}

</mosaic_0001>

<llo_original>
// kernel: tpu_custom_call.1
$region0: #{tpu_custom_call.1}
  #allocation0 [shape = 'u32[]', space=smem, size = 0x4, offset = 0x4, fixed_abs, tag = 'smem constant byte address 0x4 - core index']
  #allocation1 [shape = 'u32[144,128]{1,0:T(1,128)}', space=vmem, size = 0x12000, scoped, tag = 'internal scratch']
  #allocation2 [shape = 'f32[16,128]{1,0:T(8,128)}', space=vmem, size = 0x2000, scoped, tag = 'scratch operand']
  %s0 = inlined_call_operand.hbm [shape: bf16[16,128], index: 0, kind: input, shape index: {}]
  %s1 = inlined_call_operand.hbm [shape: bf16[128,128], index: 1, kind: input, shape index: {}]
  %s2 = inlined_call_operand.vmem [shape: f32[1,128], index: 2, kind: input, shape index: {}]
  %s3 = inlined_call_operand.hbm [shape: f32[16,128], index: 3, kind: output, shape index: {}]
  %s4 = sld [smem:[#allocation0]]
  $region38: #{tpu_custom_call.1} parent=0
    _
  %s6 = ssub.s32 1, %s4
  %s7 = scalar_select 0, %s6, %s4
  $region1: #{tpu_custom_call.1} parent=0
    #allocation3 [shape = 'u8[4096]{0}', space=vmem, size = 0x1000, scoped, tag = 'input window, operand 0, single buffered']
    #allocation4 [shape = 's32[1]{0}', space=sflag, size = 0x4, scoped, tag = 'scoped memory for tpu_custom_call.1']
    #allocation5 [shape = 's32[1]{0}', space=sflag, size = 0x4, scoped, tag = 'scoped memory for tpu_custom_call.1']
    #allocation6 [shape = 'u8[32768]{0}', space=vmem, size = 0x8000, scoped, tag = 'input window, operand 1, single buffered']
    #allocation7 [shape = 's32[1]{0}', space=sflag, size = 0x4, scoped, tag = 'scoped memory for tpu_custom_call.1']
    #allocation8 [shape = 'u8[8192]{0}', space=vmem, size = 0x2000, scoped, tag = 'output window, operand 0, single buffered']
    %8 = vsyncpa [#allocation4], 0
    %9 = vsyncpa [#allocation7], 0
    %10 = vsyncpa [#allocation5], 0
    // Predicated region
    $region2: #{tpu_custom_call.1} parent=1 // pred_check
      _
    $region3: #{tpu_custom_call.1} parent=1 // pred_check_branch
      %12 = sbr.rel (0) target = $region5
    $region4: #{tpu_custom_call.1} parent=1 // pred_region
      %s14 = ssub.s32 128, 128
      %15 = vsyncadd [#allocation4], %s14
      %s16 = sshll.u32 [#allocation3], 4
      %s17 = int_to_ptr.vmem [resolvable:$true] %s16
      %22 = dma.hbm_to_vmem [thread:$0]  %s0, 128, %s17, [#allocation4], 64, 64, 4
    $region5: #{tpu_custom_call.1} parent=1 // pred_fallthru
      _
    // Predicated region
    $region6: #{tpu_custom_call.1} parent=1 // pred_check
      _
    $region7: #{tpu_custom_call.1} parent=1 // pred_check_branch
      %24 = sbr.rel (0) target = $region9
    $region8: #{tpu_custom_call.1} parent=1 // pred_region
      %s26 = ssub.s32 1024, 1024
      %27 = vsyncadd [#allocation7], %s26
      %s28 = sshll.u32 [#allocation6], 4
      %s29 = int_to_ptr.vmem [resolvable:$true] %s28
      %34 = dma.hbm_to_vmem [thread:$0]  %s1, 1024, %s29, [#allocation7], 64, 64, 4
    $region9: #{tpu_custom_call.1} parent=1 // pred_fallthru
      _
    // Predicated region
    $region10: #{tpu_custom_call.1} parent=1 // pred_check
      _
    $region11: #{tpu_custom_call.1} parent=1 // pred_check_branch
      %36 = sbr.rel (0) target = $region13
    $region12: #{tpu_custom_call.1} parent=1 // pred_region
      _
    $region13: #{tpu_custom_call.1} parent=1 // pred_fallthru
      _
    // Predicated region
    $region14: #{tpu_custom_call.1} parent=1 // pred_check
      _
    $region15: #{tpu_custom_call.1} parent=1 // pred_check_branch
      %38 = sbr.rel (0) target = $region17
    $region16: #{tpu_custom_call.1} parent=1 // pred_region
      %39 = dma.done [#allocation4], 128
    $region17: #{tpu_custom_call.1} parent=1 // pred_fallthru
      _
    // Predicated region
    $region18: #{tpu_custom_call.1} parent=1 // pred_check
      _
    $region19: #{tpu_custom_call.1} parent=1 // pred_check_branch
      %41 = sbr.rel (0) target = $region21
    $region20: #{tpu_custom_call.1} parent=1 // pred_region
      %42 = dma.done [#allocation7], 1024
    $region21: #{tpu_custom_call.1} parent=1 // pred_fallthru
      _
    %p44 = scmp.eq.s32.totalorder 0, 0
    // Predicated region
    $region22: #{tpu_custom_call.1} parent=1 // pred_check
      %p45 = pneg %p44
    $region23: #{tpu_custom_call.1} parent=1 // pred_check_branch
      %47 = sbr.rel (%p45) target = $region25
    $region24: #{tpu_custom_call.1} parent=1 // pred_region
      %48 = vst [vmem:[#allocation2] sm:$0xff] 0.0
      %49 = vst [vmem:[#allocation2 + $0x8] sm:$0xff] 0.0
    $region25: #{tpu_custom_call.1} parent=1 // pred_fallthru
      _
    %v50 = vld [vmem:[#allocation2] sm:$0xff]
    %v51 = vld [vmem:[#allocation2 + $0x8] sm:$0xff]
    %v52 = vld [vmem:[#allocation3] sm:$0xf]
    %v53 = vld [vmem:[#allocation3 + $0x4] sm:$0xf]
    %v54 = vld [vmem:[#allocation6] sm:$0xf]
    %v55 = vld [vmem:[#allocation6 + $0x4] sm:$0xf]
    %v56 = vld [vmem:[#allocation6 + $0x8] sm:$0xf]
    %v57 = vld [vmem:[#allocation6 + $0xc] sm:$0xf]
    %v58 = vld [vmem:[#allocation6 + $0x10] sm:$0xf]
    %v59 = vld [vmem:[#allocation6 + $0x14] sm:$0xf]
    %v60 = vld [vmem:[#allocation6 + $0x18] sm:$0xf]
    %v61 = vld [vmem:[#allocation6 + $0x1c] sm:$0xf]
    %v62 = vld [vmem:[#allocation6 + $0x20] sm:$0xf]
    %v63 = vld [vmem:[#allocation6 + $0x24] sm:$0xf]
    %v64 = vld [vmem:[#allocation6 + $0x28] sm:$0xf]
    %v65 = vld [vmem:[#allocation6 + $0x2c] sm:$0xf]
    %v66 = vld [vmem:[#allocation6 + $0x30] sm:$0xf]
    %v67 = vld [vmem:[#allocation6 + $0x34] sm:$0xf]
    %v68 = vld [vmem:[#allocation6 + $0x38] sm:$0xf]
    %v69 = vld [vmem:[#allocation6 + $0x3c] sm:$0xf]
    %v72 = vunpack.c.l.b16 %v52
    %v73 = vunpack.c.l.b16 %v53
    %v74 = vpack.c.b16 %v73, %v72
    %v92 = vunpack.c.l.b16 %v54
    %v93 = vunpack.c.l.b16 %v55
    %v94 = vunpack.c.l.b16 %v56
    %v95 = vunpack.c.l.b16 %v57
    %v96 = vunpack.c.l.b16 %v58
    %v97 = vunpack.c.l.b16 %v59
    %v98 = vunpack.c.l.b16 %v60
    %v99 = vunpack.c.l.b16 %v61
    %v100 = vunpack.c.l.b16 %v62
    %v101 = vunpack.c.l.b16 %v63
    %v102 = vunpack.c.l.b16 %v64
    %v103 = vunpack.c.l.b16 %v65
    %v104 = vunpack.c.l.b16 %v66
    %v105 = vunpack.c.l.b16 %v67
    %v106 = vunpack.c.l.b16 %v68
    %v107 = vunpack.c.l.b16 %v69
    %v108 = vpack.c.b16 %v93, %v92
    %v109 = vpack.c.b16 %v95, %v94
    %v110 = vpack.c.b16 %v97, %v96
    %v111 = vpack.c.b16 %v99, %v98
    %v112 = vpack.c.b16 %v101, %v100
    %v113 = vpack.c.b16 %v103, %v102
    %v114 = vpack.c.b16 %v105, %v104
    %v115 = vpack.c.b16 %v107, %v106
    %124 = vmatprep.subr.bf16.mxu0 0
    %125 = vmatpush1.bf16.msra.mxu0 %v115
    %126 = vmatprep.subr.bf16.mxu0 0
    %127 = vmatpush1.bf16.msra.mxu0 %v114
    %128 = vmatprep.subr.bf16.mxu0 0
    %129 = vmatpush1.bf16.msra.mxu0 %v113
    %130 = vmatprep.subr.bf16.mxu0 0
    %131 = vmatpush1.bf16.msra.mxu0 %v112
    %132 = vmatprep.subr.bf16.mxu0 0
    %133 = vmatpush1.bf16.msra.mxu0 %v111
    %134 = vmatprep.subr.bf16.mxu0 0
    %135 = vmatpush1.bf16.msra.mxu0 %v110
    %136 = vmatprep.subr.bf16.mxu0 0
    %137 = vmatpush1.bf16.msra.mxu0 %v109
    %138 = vmatprep.subr.bf16.mxu0 0
    %139 = vmatpush1.bf16.msra.mxu0 %v108
    %140 = vmatprep.subr.bf16.mxu0 0
    %141 = vmatpush2.bf16.msra.mxu0 0
    %142 = vmatprep.subr.bf16.mxu0 0
    %143 = vmatpush2.bf16.msra.mxu0 0
    %144 = vmatprep.subr.bf16.mxu0 0
    %145 = vmatpush2.bf16.msra.mxu0 0
    %146 = vmatprep.subr.bf16.mxu0 0
    %147 = vmatpush2.bf16.msra.mxu0 0
    %148 = vmatprep.subr.bf16.mxu0 0
    %149 = vmatpush2.bf16.msra.mxu0 0
    %150 = vmatprep.subr.bf16.mxu0 0
    %151 = vmatpush2.bf16.msra.mxu0 0
    %152 = vmatprep.subr.bf16.mxu0 0
    %153 = vmatpush2.bf16.msra.mxu0 0
    %154 = vmatprep.subr.bf16.mxu0 0
    %155 = vmatpush2.bf16.msra.mxu0 0
    %156 = vmatprep.mubr.bf16.mxu0 0
    %157 = vmatmul.mubr.bf16.gmra.mxu0 %v74
    %v158 = vpop.f32.mrf.mxu0
    %v159 = vadd.f32 0.0, %v158
    %v160 = vpop.f32.mrf.mxu0
    %v161 = vpop.f32.mrf.mxu0
    %v162 = vadd.f32 0.0, %v161
    %v163 = vpop.f32.mrf.mxu0
    %164 = vdwg.mxu0
    %v165 = vadd.f32 %v50, %v159
    %v166 = vadd.f32 %v51, %v162
    %167 = vst [vmem:[#allocation2] sm:$0xff] %v165
    %168 = vst [vmem:[#allocation2 + $0x8] sm:$0xff] %v166
    // Predicated region
    $region26: #{tpu_custom_call.1} parent=1 // pred_check
      %p169 = pneg %p44
    $region27: #{tpu_custom_call.1} parent=1 // pred_check_branch
      %171 = sbr.rel (%p169) target = $region29
    $region28: #{tpu_custom_call.1} parent=1 // pred_region
      %v172 = vld [vmem:[#allocation2] sm:$0xff]
      %v173 = vld [vmem:[#allocation2 + $0x8] sm:$0xff]
      %v174 = vld [vmem:[%s2] sm:$0x1]
      %v176 = vlaneseq
      %v177 = vshrl.u32 %v176, 7
      %v178 = vsub.s32 0, %v177
      %v179 = vrot.slane %v174, %v178
      %v181 = vadd.f32 %v172, %v179
      %v182 = vadd.f32 %v173, %v179
      %183 = vst [vmem:[#allocation8] sm:$0xff] %v181
      %184 = vst [vmem:[#allocation8 + $0x8] sm:$0xff] %v182
    $region29: #{tpu_custom_call.1} parent=1 // pred_fallthru
      _
    // Predicated region
    $region30: #{tpu_custom_call.1} parent=1 // pred_check
      _
    $region31: #{tpu_custom_call.1} parent=1 // pred_check_branch
      %186 = sbr.rel (0) target = $region33
    $region32: #{tpu_custom_call.1} parent=1 // pred_region
      %s188 = ssub.s32 256, 256
      %189 = vsyncadd [#allocation5], %s188
      %s190 = sshll.u32 [#allocation8], 4
      %s191 = int_to_ptr.vmem [resolvable:$true] %s190
      %196 = dma.vmem_to_hbm [thread:$0]  %s191, 256, %s3, [#allocation5], 128, 128, 8
    $region33: #{tpu_custom_call.1} parent=1 // pred_fallthru
      _
    // Predicated region
    $region34: #{tpu_custom_call.1} parent=1 // pred_check
      _
    $region35: #{tpu_custom_call.1} parent=1 // pred_check_branch
      %198 = sbr.rel (0) target = $region37
    $region36: #{tpu_custom_call.1} parent=1 // pred_region
      %199 = dma.done [#allocation5], 256
    $region37: #{tpu_custom_call.1} parent=1 // pred_fallthru
      _
    %200 = vsyncpa [#allocation4], 1
    %201 = vsyncpa [#allocation7], 1
    %202 = vsyncpa [#allocation5], 1

</llo_original>
